<compile_context>
chip_gen: v5e
topology: v5e:2x2
jax: 0.10.0
libtpu: 0.0.40
codegen_flags: <defaults>
</compile_context>

<pallas_src>
import math

import jax
import jax.numpy as jnp
from jax.experimental import pallas as pl
from jax.experimental.pallas import tpu as pltpu


def _round_up(x, m):
    return (x + m - 1) // m * m


def rnn_classifier_kernel(meta_ref,   # SMEM (1,) int32: [max(seq_lengths)]
                          lens_ref,   # VMEM (TB, 1) int32
                          x_ref,      # VMEM (T*TB, D) bf16, time-major rows per tile
                          wih_ref,    # VMEM (D, 4*Hp) bf16
                          whh_ref,    # VMEM (Hp, 4*Hp) bf16
                          b_ref,      # VMEM (1, 4*Hp) f32  (b_ih + b_hh)
                          w1_ref,     # VMEM (Hp, Cp) bf16
                          b1_ref,     # VMEM (1, Cp) f32
                          w2_ref,     # VMEM (Cp, 1) bf16
                          b2_ref,     # VMEM (1, 1) f32
                          out_ref,    # VMEM (TB, 1) f32
                          gx_ref):    # VMEM scratch (T*TB, 4*Hp) f32
    TB = lens_ref.shape[0]
    TTB = x_ref.shape[0]
    T = TTB // TB
    Hp = whh_ref.shape[0]

    t_max = meta_ref[0]                      # scalar from SMEM (scalar prefetch)
    lens = lens_ref[...]                     # (TB, 1) int32

    # ---- hoisted input projection: one MXU matmul covering all timesteps ----
    gx_ref[...] = (
        jnp.dot(x_ref[...], wih_ref[...], preferred_element_type=jnp.float32)
        + b_ref[...])                        # (T*TB, 4*Hp) f32, bias folded once

    # Hoist the recurrent weight load out of the loop.
    whh = whh_ref[...]                       # (Hp, 4*Hp) bf16

    def step(t, carry):
        h, c = carry                         # (TB, Hp) f32 each
        row = pl.multiple_of(t * TB, TB)
        gx = gx_ref[pl.ds(row, TB), :]       # (TB, 4*Hp) f32, contiguous rows at time t
        gates = gx + jnp.dot(h.astype(jnp.bfloat16), whh,
                             preferred_element_type=jnp.float32)
        # PyTorch gate order [i, f, g, o]; Hp is a multiple of 128 -> lane-aligned slices.
        i_g = jax.nn.sigmoid(gates[:, 0 * Hp:1 * Hp])
        f_g = jax.nn.sigmoid(gates[:, 1 * Hp:2 * Hp])
        g_g = jnp.tanh(gates[:, 2 * Hp:3 * Hp])
        o_g = jax.nn.sigmoid(gates[:, 3 * Hp:4 * Hp])
        c_new = f_g * c + i_g * g_g
        h_new = o_g * jnp.tanh(c_new)
        upd = t < lens                       # (TB, 1): packed-sequence freeze past length
        h = jnp.where(upd, h_new, h)
        c = jnp.where(upd, c_new, c)
        return h, c

    h0 = jnp.zeros((TB, Hp), jnp.float32)
    c0 = jnp.zeros((TB, Hp), jnp.float32)
    # Recurrence bounded at max(seq_lengths): dead timesteps past the longest
    # sequence are skipped entirely.
    h, _ = jax.lax.fori_loop(0, t_max, step, (h0, c0))

    # RNN_out[:, -1, :] after pad_packed_sequence: last hidden state only for
    # rows of maximal length, zeros otherwise (faithful to the PyTorch module).
    h_last = jnp.where(lens == t_max, h, 0.0)        # (TB, Hp)

    # classification head: Linear -> ReLU -> Dropout -> Linear -> Sigmoid
    z1 = jnp.maximum(
        jnp.dot(h_last.astype(jnp.bfloat16), w1_ref[...],
                preferred_element_type=jnp.float32) + b1_ref[...], 0.0)
    # TODO(synk): nn.Dropout is identity at inference time; implemented as identity.
    logit = jnp.dot(z1.astype(jnp.bfloat16), w2_ref[...],
                    preferred_element_type=jnp.float32) + b2_ref[...]
    out_ref[...] = jax.nn.sigmoid(logit)             # (TB, 1)


def rnn_classifier_forward(input_seq, seq_lengths, params):
    """input_seq: (B, T, D) float32 (batch_first, like the PyTorch module).
    seq_lengths: (B,) int. Returns (B, 1, 1) like `pred.unsqueeze(-1)`."""
    B, T, D = input_seq.shape
    H = params["w_hh"].shape[1]
    C = params["w1"].shape[0]

    # ---- tile / padding choices ---------------------------------------------
    TB = min(128, _round_up(B, 8))       # batch tile: >=8 sublanes, <=128 MXU rows
    B_pad = _round_up(B, TB)
    nbt = B_pad // TB
    Hp = _round_up(H, 128)               # lane-aligned hidden width (zero-padded)
    Cp = _round_up(C, 128)               # lane-aligned head width (zero-padded)

    # ---- inputs: batch-pad, time-major within each tile, flat (T*TB, D) rows --
    x = jnp.pad(input_seq.astype(jnp.bfloat16), ((0, B_pad - B), (0, 0), (0, 0)))
    # (B_pad,T,D) -> (nbt,TB,T,D) -> (nbt,T,TB,D) -> (nbt, T*TB, D); row = t*TB + b
    x_tiles = (x.reshape(nbt, TB, T, D)
                 .transpose(0, 2, 1, 3)
                 .reshape(nbt, T * TB, D))

    lens = seq_lengths.astype(jnp.int32)
    t_max = jnp.max(lens).reshape(1)                              # scalar prefetch (SMEM)
    lens_p = jnp.pad(lens, (0, B_pad - B)).reshape(B_pad, 1)      # padded rows: length 0

    # ---- weights: per-gate zero-pad H->Hp, pre-transpose, cast MXU operands to bf16 --
    def pad2(a, r, c):
        return jnp.pad(a, ((0, r - a.shape[0]), (0, c - a.shape[1])))

    w_ih, w_hh = params["w_ih"], params["w_hh"]          # (4H, D), (4H, H)
    b_all = params["b_ih"] + params["b_hh"]              # (4H,)
    wih_cols, whh_cols, b_cols = [], [], []
    for k in range(4):                                   # PyTorch gate order [i, f, g, o]
        wih_cols.append(pad2(w_ih[k * H:(k + 1) * H, :].T, D, Hp))
        whh_cols.append(pad2(w_hh[k * H:(k + 1) * H, :].T, Hp, Hp))
        b_cols.append(jnp.pad(b_all[k * H:(k + 1) * H], (0, Hp - H)))
    wih_p = jnp.concatenate(wih_cols, axis=1).astype(jnp.bfloat16)   # (D, 4Hp)
    whh_p = jnp.concatenate(whh_cols, axis=1).astype(jnp.bfloat16)   # (Hp, 4Hp)
    b_p = jnp.concatenate(b_cols).reshape(1, 4 * Hp).astype(jnp.float32)

    w1_p = pad2(params["w1"].T, Hp, Cp).astype(jnp.bfloat16)         # (Hp, Cp)
    b1_p = jnp.pad(params["b1"], (0, Cp - C)).reshape(1, Cp).astype(jnp.float32)
    w2_p = pad2(params["w2"].T, Cp, 1).astype(jnp.bfloat16)          # (Cp, 1)
    b2_p = params["b2"].reshape(1, 1).astype(jnp.float32)

    # ---- grid spec: batch tiles "parallel", seq_lengths max via scalar prefetch ----
    grid_spec = pltpu.PrefetchScalarGridSpec(
        num_scalar_prefetch=1,
        grid=(nbt,),
        in_specs=[
            pl.BlockSpec((TB, 1), lambda i, m: (i, 0)),                # lens column
            pl.BlockSpec((None, T * TB, D), lambda i, m: (i, 0, 0)),   # x tile (squeezed)
            pl.BlockSpec((D, 4 * Hp), lambda i, m: (0, 0)),            # W_ih^T
            pl.BlockSpec((Hp, 4 * Hp), lambda i, m: (0, 0)),           # W_hh^T
            pl.BlockSpec((1, 4 * Hp), lambda i, m: (0, 0)),            # fused bias
            pl.BlockSpec((Hp, Cp), lambda i, m: (0, 0)),               # W1^T
            pl.BlockSpec((1, Cp), lambda i, m: (0, 0)),                # b1
            pl.BlockSpec((Cp, 1), lambda i, m: (0, 0)),                # W2^T
            pl.BlockSpec((1, 1), lambda i, m: (0, 0)),                 # b2
        ],
        out_specs=pl.BlockSpec((TB, 1), lambda i, m: (i, 0)),
        scratch_shapes=[pltpu.VMEM((T * TB, 4 * Hp), jnp.float32)],    # hoisted gates
    )

    flops = nbt * (2 * T * TB * D * 4 * Hp          # input projection
                   + 2 * T * TB * Hp * 4 * Hp       # recurrence matmuls (upper bound T)
                   + 12 * T * TB * Hp               # gate elementwise
                   + 2 * TB * Hp * Cp + 2 * TB * Cp)
    transcendentals = nbt * (5 * T * TB * Hp + TB)
    bytes_accessed = int(x_tiles.size * 2 + lens_p.size * 4
                         + wih_p.size * 2 + whh_p.size * 2 + b_p.size * 4
                         + w1_p.size * 2 + b1_p.size * 4 + w2_p.size * 2
                         + 4 + 4 + B_pad * 4)

    out = pl.pallas_call(
        rnn_classifier_kernel,
        out_shape=jax.ShapeDtypeStruct((B_pad, 1), jnp.float32),
        grid_spec=grid_spec,
        compiler_params=pltpu.CompilerParams(
            dimension_semantics=("parallel",)),      # batch tiles shard across TCs (v7x)
        cost_estimate=pl.CostEstimate(
            flops=int(flops),
            transcendentals=int(transcendentals),
            bytes_accessed=bytes_accessed),
    )(t_max, lens_p, x_tiles, wih_p, whh_p, b_p, w1_p, b1_p, w2_p, b2_p)

    return out[:B, :, None]                          # (B, 1, 1)


if __name__ == "__main__":
    key = jax.random.PRNGKey(0)
    B, T, D = 2, 8, 16          # batch, seq, input_size
    H, C = 32, 16               # rnn_embeding_size, classification_head_size

    keys = jax.random.split(key, 9)

    def unif(k, shape, scale):
        return jax.random.uniform(k, shape, jnp.float32, -scale, scale)

    kH = 1.0 / math.sqrt(H)
    kC = 1.0 / math.sqrt(C)
    params = {
        "w_ih": unif(keys[0], (4 * H, D), kH),   # LSTM weight_ih_l0
        "w_hh": unif(keys[1], (4 * H, H), kH),   # LSTM weight_hh_l0
        "b_ih": unif(keys[2], (4 * H,), kH),     # LSTM bias_ih_l0
        "b_hh": unif(keys[3], (4 * H,), kH),     # LSTM bias_hh_l0
        "w1":   unif(keys[4], (C, H), kH),       # Linear(H, C)
        "b1":   unif(keys[5], (C,), kH),
        "w2":   unif(keys[6], (1, C), kC),       # Linear(C, 1)
        "b2":   unif(keys[7], (1,), kC),
    }

    x = jax.random.normal(keys[8], (B, T, D), jnp.float32)
    seq_lengths = jnp.array([8, 5], dtype=jnp.int32)

    pred = rnn_classifier_forward(x, seq_lengths, params)
    pred = jax.block_until_ready(pred)
    assert pred.shape == (B, 1, 1), pred.shape
    assert bool(jnp.all(jnp.isfinite(pred)))
    print("KERNEL_OK")
</pallas_src>

<mosaic_0001>
module attributes {stable_mosaic.version = 11 : i64} {
  func.func @rnn_classifier_kernel(%arg0: i32, %arg1: memref<1xi32, #tpu.memory_space<smem>>, %arg2: memref<8x1xi32, #tpu.memory_space<vmem>>, %arg3: memref<1x64x16xbf16, #tpu.memory_space<vmem>>, %arg4: memref<16x512xbf16, #tpu.memory_space<vmem>>, %arg5: memref<128x512xbf16, #tpu.memory_space<vmem>>, %arg6: memref<1x512xf32, #tpu.memory_space<vmem>>, %arg7: memref<128x128xbf16, #tpu.memory_space<vmem>>, %arg8: memref<1x128xf32, #tpu.memory_space<vmem>>, %arg9: memref<128x1xbf16, #tpu.memory_space<vmem>>, %arg10: memref<1x1xf32, #tpu.memory_space<vmem>>, %arg11: memref<8x1xf32, #tpu.memory_space<vmem>>, %arg12: memref<64x512xf32, #tpu.memory_space<vmem>>) attributes {dimension_semantics = [#tpu.dimension_semantics<parallel>], iteration_bounds = array<i64: 1>, scalar_prefetch = 1 : i64, scratch_operands = 1 : i64, tpu.core_type = #tpu.core_type<tc>, window_params = [{transform_indices = @transform_0, window_bounds = array<i64: 8, 1>}, {transform_indices = @transform_1, window_bounds = array<i64: 1, 64, 16>}, {pipeline_mode = #tpu.pipeline_mode<synchronous>, transform_indices = @transform_2, window_bounds = array<i64: 16, 512>}, {pipeline_mode = #tpu.pipeline_mode<synchronous>, transform_indices = @transform_3, window_bounds = array<i64: 128, 512>}, {pipeline_mode = #tpu.pipeline_mode<synchronous>, transform_indices = @transform_4, window_bounds = array<i64: 1, 512>}, {pipeline_mode = #tpu.pipeline_mode<synchronous>, transform_indices = @transform_5, window_bounds = array<i64: 128, 128>}, {pipeline_mode = #tpu.pipeline_mode<synchronous>, transform_indices = @transform_6, window_bounds = array<i64: 1, 128>}, {pipeline_mode = #tpu.pipeline_mode<synchronous>, transform_indices = @transform_7, window_bounds = array<i64: 128, 1>}, {pipeline_mode = #tpu.pipeline_mode<synchronous>, transform_indices = @transform_8, window_bounds = array<i64: 1, 1>}, {transform_indices = @transform_9, window_bounds = array<i64: 8, 1>}]} {
    %c0 = arith.constant 0 : index
    %0 = memref.load %arg1[%c0] : memref<1xi32, #tpu.memory_space<smem>>
    %c0_0 = arith.constant 0 : index
    %c0_1 = arith.constant 0 : index
    %1 = vector.load %arg2[%c0_0, %c0_1] : memref<8x1xi32, #tpu.memory_space<vmem>>, vector<8x1xi32>
    %c0_2 = arith.constant 0 : index
    %c0_3 = arith.constant 0 : index
    %c0_4 = arith.constant 0 : index
    %2 = vector.load %arg3[%c0_2, %c0_3, %c0_4] : memref<1x64x16xbf16, #tpu.memory_space<vmem>>, vector<1x64x16xbf16>
    %3 = vector.shape_cast %2 : vector<1x64x16xbf16> to vector<64x16xbf16>
    %c0_5 = arith.constant 0 : index
    %c0_6 = arith.constant 0 : index
    %4 = vector.load %arg4[%c0_5, %c0_6] : memref<16x512xbf16, #tpu.memory_space<vmem>>, vector<16x512xbf16>
    %cst = arith.constant dense<0.000000e+00> : vector<64x512xf32>
    %5 = tpu.matmul %3, %4, %cst {dimension_numbers = #tpu.dot_dimension_numbers<[1], [0], [0], [1], [0, 0, 1, 1], [], []>} : vector<64x16xbf16>, vector<16x512xbf16>, vector<64x512xf32> -> vector<64x512xf32>
    %c0_7 = arith.constant 0 : index
    %c0_8 = arith.constant 0 : index
    %6 = vector.load %arg6[%c0_7, %c0_8] : memref<1x512xf32, #tpu.memory_space<vmem>>, vector<1x512xf32>
    %7 = vector.broadcast %6 : vector<1x512xf32> to vector<64x512xf32>
    %8 = arith.addf %5, %7 : vector<64x512xf32>
    %c0_9 = arith.constant 0 : index
    %c0_10 = arith.constant 0 : index
    %9 = vector.load %arg12[%c0_9, %c0_10] : memref<64x512xf32, #tpu.memory_space<vmem>>, vector<64x512xf32>
    tpu.vector_store %arg12[%c0_9, %c0_10], %8 {strides = array<i32>} : memref<64x512xf32, #tpu.memory_space<vmem>>, vector<64x512xf32>,
    %c0_11 = arith.constant 0 : index
    %c0_12 = arith.constant 0 : index
    %10 = vector.load %arg5[%c0_11, %c0_12] : memref<128x512xbf16, #tpu.memory_space<vmem>>, vector<128x512xbf16>
    %cst_13 = arith.constant 0.000000e+00 : f32
    %11 = vector.broadcast %cst_13 : f32 to vector<8x128xf32>
    %cst_14 = arith.constant 0.000000e+00 : f32
    %12 = vector.broadcast %cst_14 : f32 to vector<8x128xf32>
    %c0_i32 = arith.constant 0 : i32
    %13 = arith.subi %0, %c0_i32 : i32
    %14 = arith.addi %c0_i32, %13 : i32
    %c1_i32 = arith.constant 1 : i32
    %15:2 = scf.for %arg13 = %c0_i32 to %14 step %c1_i32 iter_args(%arg14 = %11, %arg15 = %12) -> (vector<8x128xf32>, vector<8x128xf32>)  : i32 {
      %c8_i32 = arith.constant 8 : i32
      %42 = arith.muli %arg13, %c8_i32 : i32
      %43 = tpu.assume_multiple %42, 8 : i32
      %44 = arith.index_cast %43 : i32 to index
      %c0_30 = arith.constant 0 : index
      %45 = vector.load %arg12[%44, %c0_30] : memref<64x512xf32, #tpu.memory_space<vmem>>, vector<8x512xf32>
      %46 = arith.truncf %arg14 : vector<8x128xf32> to vector<8x128xbf16>
      %cst_31 = arith.constant dense<0.000000e+00> : vector<8x512xf32>
      %47 = tpu.matmul %46, %10, %cst_31 {dimension_numbers = #tpu.dot_dimension_numbers<[1], [0], [0], [1], [0, 0, 1, 1], [], []>} : vector<8x128xbf16>, vector<128x512xbf16>, vector<8x512xf32> -> vector<8x512xf32>
      %48 = arith.addf %45, %47 : vector<8x512xf32>
      %49 = vector.extract_strided_slice %48 {offsets = [0, 0], sizes = [8, 128], strides = [1, 1]} : vector<8x512xf32> to vector<8x128xf32>
      %50 = arith.negf %49 : vector<8x128xf32>
      %51 = math.exp %50 : vector<8x128xf32>
      %cst_32 = arith.constant 1.000000e+00 : f32
      %52 = vector.broadcast %cst_32 : f32 to vector<8x128xf32>
      %53 = arith.addf %52, %51 : vector<8x128xf32>
      %54 = arith.divf %52, %53 : vector<8x128xf32>
      %55 = vector.extract_strided_slice %48 {offsets = [0, 128], sizes = [8, 128], strides = [1, 1]} : vector<8x512xf32> to vector<8x128xf32>
      %56 = arith.negf %55 : vector<8x128xf32>
      %57 = math.exp %56 : vector<8x128xf32>
      %cst_33 = arith.constant 1.000000e+00 : f32
      %58 = vector.broadcast %cst_33 : f32 to vector<8x128xf32>
      %59 = arith.addf %58, %57 : vector<8x128xf32>
      %60 = arith.divf %58, %59 : vector<8x128xf32>
      %61 = vector.extract_strided_slice %48 {offsets = [0, 256], sizes = [8, 128], strides = [1, 1]} : vector<8x512xf32> to vector<8x128xf32>
      %62 = math.tanh %61 : vector<8x128xf32>
      %63 = vector.extract_strided_slice %48 {offsets = [0, 384], sizes = [8, 128], strides = [1, 1]} : vector<8x512xf32> to vector<8x128xf32>
      %64 = arith.negf %63 : vector<8x128xf32>
      %65 = math.exp %64 : vector<8x128xf32>
      %cst_34 = arith.constant 1.000000e+00 : f32
      %66 = vector.broadcast %cst_34 : f32 to vector<8x128xf32>
      %67 = arith.addf %66, %65 : vector<8x128xf32>
      %68 = arith.divf %66, %67 : vector<8x128xf32>
      %69 = arith.mulf %60, %arg15 : vector<8x128xf32>
      %70 = arith.mulf %54, %62 : vector<8x128xf32>
      %71 = arith.addf %69, %70 : vector<8x128xf32>
      %72 = math.tanh %71 : vector<8x128xf32>
      %73 = arith.mulf %68, %72 : vector<8x128xf32>
      %74 = vector.broadcast %arg13 : i32 to vector<8x1xi32>
      %75 = arith.cmpi slt, %74, %1 : vector<8x1xi32>
      %76 = vector.shape_cast %75 : vector<8x1xi1> to vector<8x1xi1>
      %77 = vector.broadcast %76 : vector<8x1xi1> to vector<8x128xi1>
      %78 = arith.select %77, %73, %arg14 : vector<8x128xi1>, vector<8x128xf32>
      %79 = vector.shape_cast %75 : vector<8x1xi1> to vector<8x1xi1>
      %80 = vector.broadcast %79 : vector<8x1xi1> to vector<8x128xi1>
      %81 = arith.select %80, %71, %arg15 : vector<8x128xi1>, vector<8x128xf32>
      scf.yield %78, %81 : vector<8x128xf32>, vector<8x128xf32>
    }
    %16 = vector.broadcast %0 : i32 to vector<8x1xi32>
    %17 = arith.cmpi eq, %1, %16 : vector<8x1xi32>
    %cst_15 = arith.constant 0.000000e+00 : f32
    %18 = vector.shape_cast %17 : vector<8x1xi1> to vector<8x1xi1>
    %19 = vector.broadcast %18 : vector<8x1xi1> to vector<8x128xi1>
    %20 = vector.broadcast %cst_15 : f32 to vector<8x128xf32>
    %21 = arith.select %19, %15#0, %20 : vector<8x128xi1>, vector<8x128xf32>
    %22 = arith.truncf %21 : vector<8x128xf32> to vector<8x128xbf16>
    %c0_16 = arith.constant 0 : index
    %c0_17 = arith.constant 0 : index
    %23 = vector.load %arg7[%c0_16, %c0_17] : memref<128x128xbf16, #tpu.memory_space<vmem>>, vector<128x128xbf16>
    %cst_18 = arith.constant dense<0.000000e+00> : vector<8x128xf32>
    %24 = tpu.matmul %22, %23, %cst_18 {dimension_numbers = #tpu.dot_dimension_numbers<[1], [0], [0], [1], [0, 0, 1, 1], [], []>} : vector<8x128xbf16>, vector<128x128xbf16>, vector<8x128xf32> -> vector<8x128xf32>
    %c0_19 = arith.constant 0 : index
    %c0_20 = arith.constant 0 : index
    %25 = vector.load %arg8[%c0_19, %c0_20] : memref<1x128xf32, #tpu.memory_space<vmem>>, vector<1x128xf32>
    %26 = vector.broadcast %25 : vector<1x128xf32> to vector<8x128xf32>
    %27 = arith.addf %24, %26 : vector<8x128xf32>
    %cst_21 = arith.constant 0.000000e+00 : f32
    %28 = vector.broadcast %cst_21 : f32 to vector<8x128xf32>
    %29 = arith.maximumf %27, %28 : vector<8x128xf32>
    %30 = arith.truncf %29 : vector<8x128xf32> to vector<8x128xbf16>
    %c0_22 = arith.constant 0 : index
    %c0_23 = arith.constant 0 : index
    %31 = vector.load %arg9[%c0_22, %c0_23] : memref<128x1xbf16, #tpu.memory_space<vmem>>, vector<128x1xbf16>
    %cst_24 = arith.constant dense<0.000000e+00> : vector<8x1xf32>
    %32 = tpu.matmul %30, %31, %cst_24 {dimension_numbers = #tpu.dot_dimension_numbers<[1], [0], [0], [1], [0, 0, 1, 1], [], []>} : vector<8x128xbf16>, vector<128x1xbf16>, vector<8x1xf32> -> vector<8x1xf32>
    %c0_25 = arith.constant 0 : index
    %c0_26 = arith.constant 0 : index
    %33 = vector.load %arg10[%c0_25, %c0_26] : memref<1x1xf32, #tpu.memory_space<vmem>>, vector<1x1xf32>
    %34 = vector.broadcast %33 : vector<1x1xf32> to vector<8x1xf32>
    %35 = arith.addf %32, %34 : vector<8x1xf32>
    %36 = arith.negf %35 : vector<8x1xf32>
    %37 = math.exp %36 : vector<8x1xf32>
    %cst_27 = arith.constant 1.000000e+00 : f32
    %38 = vector.broadcast %cst_27 : f32 to vector<8x1xf32>
    %39 = arith.addf %38, %37 : vector<8x1xf32>
    %40 = arith.divf %38, %39 : vector<8x1xf32>
    %c0_28 = arith.constant 0 : index
    %c0_29 = arith.constant 0 : index
    %41 = vector.load %arg11[%c0_28, %c0_29] : memref<8x1xf32, #tpu.memory_space<vmem>>, vector<8x1xf32>
    tpu.vector_store %arg11[%c0_28, %c0_29], %40 {strides = array<i32>} : memref<8x1xf32, #tpu.memory_space<vmem>>, vector<8x1xf32>,
    return
  }
  func.func @transform_0(%arg0: i32, %arg1: memref<1xi32, #tpu.memory_space<smem>>) -> (i32, i32) {
    %c0_i32 = arith.constant 0 : i32
    %c0_i32_0 = arith.constant 0 : i32
    return %arg0, %c0_i32 : i32, i32
  }
  func.func @transform_1(%arg0: i32, %arg1: memref<1xi32, #tpu.memory_space<smem>>) -> (i32, i32, i32) {
    %c0_i32 = arith.constant 0 : i32
    %c0_i32_0 = arith.constant 0 : i32
    %c0_i32_1 = arith.constant 0 : i32
    return %arg0, %c0_i32, %c0_i32_0 : i32, i32, i32
  }
  func.func @transform_2(%arg0: i32, %arg1: memref<1xi32, #tpu.memory_space<smem>>) -> (i32, i32) {
    %c0_i32 = arith.constant 0 : i32
    %c0_i32_0 = arith.constant 0 : i32
    %c0_i32_1 = arith.constant 0 : i32
    return %c0_i32, %c0_i32_0 : i32, i32
  }
  func.func @transform_3(%arg0: i32, %arg1: memref<1xi32, #tpu.memory_space<smem>>) -> (i32, i32) {
    %c0_i32 = arith.constant 0 : i32
    %c0_i32_0 = arith.constant 0 : i32
    %c0_i32_1 = arith.constant 0 : i32
    return %c0_i32, %c0_i32_0 : i32, i32
  }
  func.func @transform_4(%arg0: i32, %arg1: memref<1xi32, #tpu.memory_space<smem>>) -> (i32, i32) {
    %c0_i32 = arith.constant 0 : i32
    %c0_i32_0 = arith.constant 0 : i32
    %c0_i32_1 = arith.constant 0 : i32
    return %c0_i32, %c0_i32_0 : i32, i32
  }
  func.func @transform_5(%arg0: i32, %arg1: memref<1xi32, #tpu.memory_space<smem>>) -> (i32, i32) {
    %c0_i32 = arith.constant 0 : i32
    %c0_i32_0 = arith.constant 0 : i32
    %c0_i32_1 = arith.constant 0 : i32
    return %c0_i32, %c0_i32_0 : i32, i32
  }
  func.func @transform_6(%arg0: i32, %arg1: memref<1xi32, #tpu.memory_space<smem>>) -> (i32, i32) {
    %c0_i32 = arith.constant 0 : i32
    %c0_i32_0 = arith.constant 0 : i32
    %c0_i32_1 = arith.constant 0 : i32
    return %c0_i32, %c0_i32_0 : i32, i32
  }
  func.func @transform_7(%arg0: i32, %arg1: memref<1xi32, #tpu.memory_space<smem>>) -> (i32, i32) {
    %c0_i32 = arith.constant 0 : i32
    %c0_i32_0 = arith.constant 0 : i32
    %c0_i32_1 = arith.constant 0 : i32
    return %c0_i32, %c0_i32_0 : i32, i32
  }
  func.func @transform_8(%arg0: i32, %arg1: memref<1xi32, #tpu.memory_space<smem>>) -> (i32, i32) {
    %c0_i32 = arith.constant 0 : i32
    %c0_i32_0 = arith.constant 0 : i32
    %c0_i32_1 = arith.constant 0 : i32
    return %c0_i32, %c0_i32_0 : i32, i32
  }
  func.func @transform_9(%arg0: i32, %arg1: memref<1xi32, #tpu.memory_space<smem>>) -> (i32, i32) {
    %c0_i32 = arith.constant 0 : i32
    %c0_i32_0 = arith.constant 0 : i32
    return %arg0, %c0_i32 : i32, i32
  }
}

</mosaic_0001>

<llo_original>
// kernel: tpu_custom_call.1
$region0: #{tpu_custom_call.1}
  #allocation0 [shape = 'u32[]', space=smem, size = 0x4, offset = 0x4, fixed_abs, tag = 'smem constant byte address 0x4 - core index']
  #allocation1 [shape = 'u32[72,128]{1,0:T(1,128)}', space=vmem, size = 0x9000, scoped, tag = 'internal scratch']
  #allocation2 [shape = 'f32[64,512]{1,0:T(8,128)}', space=vmem, size = 0x20000, scoped, tag = 'scratch operand']
  #allocation3 [shape = 's32[1]{0}', space=sflag, size = 0x4, scoped, tag = 'scoped memory for tpu_custom_call.1']
  #allocation4 [shape = 's32[1]{0:T(128)S(6)}', space=smem, size = 0x200, scoped, tag = 'prefetched SMEM operand 0']
  #allocation5 [shape = 'f32[1,1]{1,0:T(1,128)S(1)}', space=vmem, size = 0x200, scoped, tag = 'scoped memory for tpu_custom_call.1']
  %s0 = inlined_call_operand.<no memory space> [shape: s32[1], index: 0, kind: input, shape index: {}]
  %s1 = inlined_call_operand.vmem [shape: s32[8,1], index: 1, kind: input, shape index: {}]
  %s2 = inlined_call_operand.vmem [shape: bf16[1,64,16], index: 2, kind: input, shape index: {}]
  %s3 = inlined_call_operand.vmem [shape: bf16[16,512], index: 3, kind: input, shape index: {}]
  %s4 = inlined_call_operand.hbm [shape: bf16[128,512], index: 4, kind: input, shape index: {}]
  %s5 = inlined_call_operand.vmem [shape: f32[1,512], index: 5, kind: input, shape index: {}]
  %s6 = inlined_call_operand.vmem [shape: bf16[128,128], index: 6, kind: input, shape index: {}]
  %s7 = inlined_call_operand.vmem [shape: f32[1,128], index: 7, kind: input, shape index: {}]
  %s8 = inlined_call_operand.vmem [shape: bf16[128,1], index: 8, kind: input, shape index: {}]
  %s9 = inlined_call_operand.<no memory space> [shape: f32[1,1], index: 9, kind: input, shape index: {}]
  %s10 = inlined_call_operand.vmem [shape: f32[8,1], index: 10, kind: output, shape index: {}]
  %s11 = sld [smem:[#allocation0]]
  $region57: #{tpu_custom_call.1} parent=0
    _
  %s13 = ssub.s32 1, %s11
  %s14 = scalar_select 0, %s13, %s11
  %15 = sst [smem:[#allocation4]] %s0
  %v16 = vstv %s9
  %17 = vst [vmem:[#allocation5] sm:$0x1] %v16
  $region1: #{tpu_custom_call.1} parent=0
    #allocation6 [shape = 'u8[131072]{0}', space=vmem, size = 0x20000, scoped, tag = 'input window, operand 4, single buffered']
    #allocation7 [shape = 's32[1]{0}', space=sflag, size = 0x4, scoped, tag = 'scoped memory for tpu_custom_call.1']
    %18 = vsyncpa [#allocation7], 0
    // Predicated region
    $region2: #{tpu_custom_call.1} parent=1 // pred_check
      _
    $region3: #{tpu_custom_call.1} parent=1 // pred_check_branch
      %20 = sbr.rel (0) target = $region5
    $region4: #{tpu_custom_call.1} parent=1 // pred_region
      _
    $region5: #{tpu_custom_call.1} parent=1 // pred_fallthru
      _
    // Predicated region
    $region6: #{tpu_custom_call.1} parent=1 // pred_check
      _
    $region7: #{tpu_custom_call.1} parent=1 // pred_check_branch
      %22 = sbr.rel (0) target = $region9
    $region8: #{tpu_custom_call.1} parent=1 // pred_region
      _
    $region9: #{tpu_custom_call.1} parent=1 // pred_fallthru
      _
    // Predicated region
    $region10: #{tpu_custom_call.1} parent=1 // pred_check
      _
    $region11: #{tpu_custom_call.1} parent=1 // pred_check_branch
      %24 = sbr.rel (0) target = $region13
    $region12: #{tpu_custom_call.1} parent=1 // pred_region
      _
    $region13: #{tpu_custom_call.1} parent=1 // pred_fallthru
      _
    // Predicated region
    $region14: #{tpu_custom_call.1} parent=1 // pred_check
      _
    $region15: #{tpu_custom_call.1} parent=1 // pred_check_branch
      %26 = sbr.rel (0) target = $region17
    $region16: #{tpu_custom_call.1} parent=1 // pred_region
      %28 = vsyncadd [#allocation7], 0
      %s29 = sshll.u32 %s4, 4
      %s30 = int_to_ptr.hbm [resolvable:$true] %s29
      %s31 = sshll.u32 [#allocation6], 4
      %s32 = int_to_ptr.vmem [resolvable:$true] %s31
      %37 = dma.hbm_to_vmem [thread:$0]  %s30, 4096, %s32, [#allocation7], 256, 256, 16
    $region17: #{tpu_custom_call.1} parent=1 // pred_fallthru
      _
    // Predicated region
    $region18: #{tpu_custom_call.1} parent=1 // pred_check
      _
    $region19: #{tpu_custom_call.1} parent=1 // pred_check_branch
      %39 = sbr.rel (0) target = $region21
    $region20: #{tpu_custom_call.1} parent=1 // pred_region
      _
    $region21: #{tpu_custom_call.1} parent=1 // pred_fallthru
      _
    // Predicated region
    $region22: #{tpu_custom_call.1} parent=1 // pred_check
      _
    $region23: #{tpu_custom_call.1} parent=1 // pred_check_branch
      %41 = sbr.rel (0) target = $region25
    $region24: #{tpu_custom_call.1} parent=1 // pred_region
      _
    $region25: #{tpu_custom_call.1} parent=1 // pred_fallthru
      _
    // Predicated region
    $region26: #{tpu_custom_call.1} parent=1 // pred_check
      _
    $region27: #{tpu_custom_call.1} parent=1 // pred_check_branch
      %43 = sbr.rel (0) target = $region29
    $region28: #{tpu_custom_call.1} parent=1 // pred_region
      _
    $region29: #{tpu_custom_call.1} parent=1 // pred_fallthru
      _
    // Predicated region
    $region30: #{tpu_custom_call.1} parent=1 // pred_check
      _
    $region31: #{tpu_custom_call.1} parent=1 // pred_check_branch
      %45 = sbr.rel (0) target = $region33
    $region32: #{tpu_custom_call.1} parent=1 // pred_region
      _
    $region33: #{tpu_custom_call.1} parent=1 // pred_fallthru
      _
    // Predicated region
    $region34: #{tpu_custom_call.1} parent=1 // pred_check
      _
    $region35: #{tpu_custom_call.1} parent=1 // pred_check_branch
      %47 = sbr.rel (0) target = $region37
    $region36: #{tpu_custom_call.1} parent=1 // pred_region
      _
    $region37: #{tpu_custom_call.1} parent=1 // pred_fallthru
      _
    // Predicated region
    $region38: #{tpu_custom_call.1} parent=1 // pred_check
      _
    $region39: #{tpu_custom_call.1} parent=1 // pred_check_branch
      %49 = sbr.rel (0) target = $region41
    $region40: #{tpu_custom_call.1} parent=1 // pred_region
      %51 = dma.done [#allocation7], 4096
    $region41: #{tpu_custom_call.1} parent=1 // pred_fallthru
      _
    %s53 = sld [smem:[#allocation4]]
    %v54 = vld [vmem:[%s1] sm:$0xff]
    %v55 = vld [vmem:[%s2] sm:$0xf]
    %v56 = vld [vmem:[%s2 + $0x4] sm:$0xf]
    %v57 = vld [vmem:[%s2 + $0x8] sm:$0xf]
    %v58 = vld [vmem:[%s2 + $0xc] sm:$0xf]
    %v59 = vld [vmem:[%s2 + $0x10] sm:$0xf]
    %v60 = vld [vmem:[%s2 + $0x14] sm:$0xf]
    %v61 = vld [vmem:[%s2 + $0x18] sm:$0xf]
    %v62 = vld [vmem:[%s2 + $0x1c] sm:$0xf]
    %v63 = vld [vmem:[%s3] sm:$0xff]
    %v64 = vld [vmem:[%s3 + $0x8] sm:$0xff]
    %v65 = vld [vmem:[%s3 + $0x10] sm:$0xff]
    %v66 = vld [vmem:[%s3 + $0x18] sm:$0xff]
    %v67 = vld [vmem:[%s5] sm:$0xf]
    %v69 = vperm.slane %v67, 0
    %v70 = vperm.slane %v67, 1
    %v71 = vperm.slane %v67, 2
    %v72 = vperm.slane %v67, 3
    %v85 = vunpack.c.l.b16 %v55
    %v86 = vunpack.c.l.b16 %v56
    %v87 = vunpack.c.l.b16 %v57
    %v88 = vunpack.c.l.b16 %v58
    %v89 = vunpack.c.l.b16 %v59
    %v90 = vunpack.c.l.b16 %v60
    %v91 = vunpack.c.l.b16 %v61
    %v92 = vunpack.c.l.b16 %v62
    %v93 = vpack.c.b16 %v86, %v85
    %v94 = vpack.c.b16 %v88, %v87
    %v95 = vpack.c.b16 %v90, %v89
    %v96 = vpack.c.b16 %v92, %v91
    %v101 = vunpack.c.l.b16 %v63
    %v102 = vunpack.c.h.b16 %v63
    %v103 = vunpack.c.l.b16 %v64
    %v104 = vunpack.c.h.b16 %v64
    %v105 = vunpack.c.l.b16 %v65
    %v106 = vunpack.c.h.b16 %v65
    %v107 = vunpack.c.l.b16 %v66
    %v108 = vunpack.c.h.b16 %v66
    %v109 = vpack.c.b16 %v105, %v101
    %v110 = vpack.c.b16 %v106, %v102
    %v111 = vpack.c.b16 %v107, %v103
    %v112 = vpack.c.b16 %v108, %v104
    %vm117 = vcmask 130048
    %v119 = vsel %vm117, %v93, 0
    %v122 = vsel %vm117, %v94, 0
    %v125 = vsel %vm117, %v95, 0
    %v128 = vsel %vm117, %v96, 0
    %130 = vmatpush.bf16.msra.mxu0 0
    %131 = vmatpush.bf16.msra.mxu0 0
    %132 = vmatpush.bf16.msra.mxu0 0
    %133 = vmatpush.bf16.msra.mxu0 0
    %134 = vmatpush.bf16.msra.mxu0 0
    %135 = vmatpush.bf16.msra.mxu0 0
    %136 = vmatpush.bf16.msra.mxu0 0
    %137 = vmatpush.bf16.msra.mxu0 %v109
    %138 = vmatmul.bf16.gmra.mxu0 %v119
    %v139 = vpop.f32.mrf.mxu0
    %v140 = vadd.f32 %v69, %v139
    %v141 = vpop.f32.mrf.mxu0
    %v142 = vadd.f32 %v69, %v141
    %143 = vmatmul.bf16.gmra.mxu0 %v122
    %v144 = vpop.f32.mrf.mxu0
    %v145 = vadd.f32 %v69, %v144
    %v146 = vpop.f32.mrf.mxu0
    %v147 = vadd.f32 %v69, %v146
    %148 = vmatmul.bf16.gmra.mxu0 %v125
    %v149 = vpop.f32.mrf.mxu0
    %v150 = vadd.f32 %v69, %v149
    %v151 = vpop.f32.mrf.mxu0
    %v152 = vadd.f32 %v69, %v151
    %153 = vmatmul.bf16.gmra.mxu0 %v128
    %v154 = vpop.f32.mrf.mxu0
    %v155 = vadd.f32 %v69, %v154
    %v156 = vpop.f32.mrf.mxu0
    %v157 = vadd.f32 %v69, %v156
    %158 = vdwg.mxu0
    %159 = vmatpush.bf16.msra.mxu0 0
    %160 = vmatpush.bf16.msra.mxu0 0
    %161 = vmatpush.bf16.msra.mxu0 0
    %162 = vmatpush.bf16.msra.mxu0 0
    %163 = vmatpush.bf16.msra.mxu0 0
    %164 = vmatpush.bf16.msra.mxu0 0
    %165 = vmatpush.bf16.msra.mxu0 0
    %166 = vmatpush.bf16.msra.mxu0 %v110
    %167 = vmatmul.bf16.gmra.mxu0 %v119
    %v168 = vpop.f32.mrf.mxu0
    %v169 = vadd.f32 %v70, %v168
    %v170 = vpop.f32.mrf.mxu0
    %v171 = vadd.f32 %v70, %v170
    %172 = vmatmul.bf16.gmra.mxu0 %v122
    %v173 = vpop.f32.mrf.mxu0
    %v174 = vadd.f32 %v70, %v173
    %v175 = vpop.f32.mrf.mxu0
    %v176 = vadd.f32 %v70, %v175
    %177 = vmatmul.bf16.gmra.mxu0 %v125
    %v178 = vpop.f32.mrf.mxu0
    %v179 = vadd.f32 %v70, %v178
    %v180 = vpop.f32.mrf.mxu0
    %v181 = vadd.f32 %v70, %v180
    %182 = vmatmul.bf16.gmra.mxu0 %v128
    %v183 = vpop.f32.mrf.mxu0
    %v184 = vadd.f32 %v70, %v183
    %v185 = vpop.f32.mrf.mxu0
    %v186 = vadd.f32 %v70, %v185
    %187 = vdwg.mxu0
    %188 = vmatpush.bf16.msra.mxu0 0
    %189 = vmatpush.bf16.msra.mxu0 0
    %190 = vmatpush.bf16.msra.mxu0 0
    %191 = vmatpush.bf16.msra.mxu0 0
    %192 = vmatpush.bf16.msra.mxu0 0
    %193 = vmatpush.bf16.msra.mxu0 0
    %194 = vmatpush.bf16.msra.mxu0 0
    %195 = vmatpush.bf16.msra.mxu0 %v111
    %196 = vmatmul.bf16.gmra.mxu0 %v119
    %v197 = vpop.f32.mrf.mxu0
    %v198 = vadd.f32 %v71, %v197
    %v199 = vpop.f32.mrf.mxu0
    %v200 = vadd.f32 %v71, %v199
    %201 = vmatmul.bf16.gmra.mxu0 %v122
    %v202 = vpop.f32.mrf.mxu0
    %v203 = vadd.f32 %v71, %v202
    %v204 = vpop.f32.mrf.mxu0
    %v205 = vadd.f32 %v71, %v204
    %206 = vmatmul.bf16.gmra.mxu0 %v125
    %v207 = vpop.f32.mrf.mxu0
    %v208 = vadd.f32 %v71, %v207
    %v209 = vpop.f32.mrf.mxu0
    %v210 = vadd.f32 %v71, %v209
    %211 = vmatmul.bf16.gmra.mxu0 %v128
    %v212 = vpop.f32.mrf.mxu0
    %v213 = vadd.f32 %v71, %v212
    %v214 = vpop.f32.mrf.mxu0
    %v215 = vadd.f32 %v71, %v214
    %216 = vdwg.mxu0
    %217 = vmatpush.bf16.msra.mxu0 0
    %218 = vmatpush.bf16.msra.mxu0 0
    %219 = vmatpush.bf16.msra.mxu0 0
    %220 = vmatpush.bf16.msra.mxu0 0
    %221 = vmatpush.bf16.msra.mxu0 0
    %222 = vmatpush.bf16.msra.mxu0 0
    %223 = vmatpush.bf16.msra.mxu0 0
    %224 = vmatpush.bf16.msra.mxu0 %v112
    %225 = vmatmul.bf16.gmra.mxu0 %v119
    %v226 = vpop.f32.mrf.mxu0
    %v227 = vadd.f32 %v72, %v226
    %v228 = vpop.f32.mrf.mxu0
    %v229 = vadd.f32 %v72, %v228
    %230 = vmatmul.bf16.gmra.mxu0 %v122
    %v231 = vpop.f32.mrf.mxu0
    %v232 = vadd.f32 %v72, %v231
    %v233 = vpop.f32.mrf.mxu0
    %v234 = vadd.f32 %v72, %v233
    %235 = vmatmul.bf16.gmra.mxu0 %v125
    %v236 = vpop.f32.mrf.mxu0
    %v237 = vadd.f32 %v72, %v236
    %v238 = vpop.f32.mrf.mxu0
    %v239 = vadd.f32 %v72, %v238
    %240 = vmatmul.bf16.gmra.mxu0 %v128
    %v241 = vpop.f32.mrf.mxu0
    %v242 = vadd.f32 %v72, %v241
    %v243 = vpop.f32.mrf.mxu0
    %v244 = vadd.f32 %v72, %v243
    %245 = vdwg.mxu0
    %246 = vst [vmem:[#allocation2] sm:$0xff] %v140
    %247 = vst [vmem:[#allocation2 + $0x8] sm:$0xff] %v169
    %248 = vst [vmem:[#allocation2 + $0x10] sm:$0xff] %v198
    %249 = vst [vmem:[#allocation2 + $0x18] sm:$0xff] %v227
    %250 = vst [vmem:[#allocation2 + $0x20] sm:$0xff] %v142
    %251 = vst [vmem:[#allocation2 + $0x28] sm:$0xff] %v171
    %252 = vst [vmem:[#allocation2 + $0x30] sm:$0xff] %v200
    %253 = vst [vmem:[#allocation2 + $0x38] sm:$0xff] %v229
    %254 = vst [vmem:[#allocation2 + $0x40] sm:$0xff] %v145
    %255 = vst [vmem:[#allocation2 + $0x48] sm:$0xff] %v174
    %256 = vst [vmem:[#allocation2 + $0x50] sm:$0xff] %v203
    %257 = vst [vmem:[#allocation2 + $0x58] sm:$0xff] %v232
    %258 = vst [vmem:[#allocation2 + $0x60] sm:$0xff] %v147
    %259 = vst [vmem:[#allocation2 + $0x68] sm:$0xff] %v176
    %260 = vst [vmem:[#allocation2 + $0x70] sm:$0xff] %v205
    %261 = vst [vmem:[#allocation2 + $0x78] sm:$0xff] %v234
    %262 = vst [vmem:[#allocation2 + $0x80] sm:$0xff] %v150
    %263 = vst [vmem:[#allocation2 + $0x88] sm:$0xff] %v179
    %264 = vst [vmem:[#allocation2 + $0x90] sm:$0xff] %v208
    %265 = vst [vmem:[#allocation2 + $0x98] sm:$0xff] %v237
    %266 = vst [vmem:[#allocation2 + $0xa0] sm:$0xff] %v152
    %267 = vst [vmem:[#allocation2 + $0xa8] sm:$0xff] %v181
    %268 = vst [vmem:[#allocation2 + $0xb0] sm:$0xff] %v210
    %269 = vst [vmem:[#allocation2 + $0xb8] sm:$0xff] %v239
    %270 = vst [vmem:[#allocation2 + $0xc0] sm:$0xff] %v155
    %271 = vst [vmem:[#allocation2 + $0xc8] sm:$0xff] %v184
    %272 = vst [vmem:[#allocation2 + $0xd0] sm:$0xff] %v213
    %273 = vst [vmem:[#allocation2 + $0xd8] sm:$0xff] %v242
    %274 = vst [vmem:[#allocation2 + $0xe0] sm:$0xff] %v157
    %275 = vst [vmem:[#allocation2 + $0xe8] sm:$0xff] %v186
    %276 = vst [vmem:[#allocation2 + $0xf0] sm:$0xff] %v215
    %277 = vst [vmem:[#allocation2 + $0xf8] sm:$0xff] %v244
    %v278 = vld [vmem:[#allocation6] sm:$0xff]
    %v279 = vld [vmem:[#allocation6 + $0x8] sm:$0xff]
    %v280 = vld [vmem:[#allocation6 + $0x10] sm:$0xff]
    %v281 = vld [vmem:[#allocation6 + $0x18] sm:$0xff]
    %v282 = vld [vmem:[#allocation6 + $0x20] sm:$0xff]
    %v283 = vld [vmem:[#allocation6 + $0x28] sm:$0xff]
    %v284 = vld [vmem:[#allocation6 + $0x30] sm:$0xff]
    %v285 = vld [vmem:[#allocation6 + $0x38] sm:$0xff]
    %v286 = vld [vmem:[#allocation6 + $0x40] sm:$0xff]
    %v287 = vld [vmem:[#allocation6 + $0x48] sm:$0xff]
    %v288 = vld [vmem:[#allocation6 + $0x50] sm:$0xff]
    %v289 = vld [vmem:[#allocation6 + $0x58] sm:$0xff]
    %v290 = vld [vmem:[#allocation6 + $0x60] sm:$0xff]
    %v291 = vld [vmem:[#allocation6 + $0x68] sm:$0xff]
    %v292 = vld [vmem:[#allocation6 + $0x70] sm:$0xff]
    %v293 = vld [vmem:[#allocation6 + $0x78] sm:$0xff]
    %v294 = vld [vmem:[#allocation6 + $0x80] sm:$0xff]
    %v295 = vld [vmem:[#allocation6 + $0x88] sm:$0xff]
    %v296 = vld [vmem:[#allocation6 + $0x90] sm:$0xff]
    %v297 = vld [vmem:[#allocation6 + $0x98] sm:$0xff]
    %v298 = vld [vmem:[#allocation6 + $0xa0] sm:$0xff]
    %v299 = vld [vmem:[#allocation6 + $0xa8] sm:$0xff]
    %v300 = vld [vmem:[#allocation6 + $0xb0] sm:$0xff]
    %v301 = vld [vmem:[#allocation6 + $0xb8] sm:$0xff]
    %v302 = vld [vmem:[#allocation6 + $0xc0] sm:$0xff]
    %v303 = vld [vmem:[#allocation6 + $0xc8] sm:$0xff]
    %v304 = vld [vmem:[#allocation6 + $0xd0] sm:$0xff]
    %v305 = vld [vmem:[#allocation6 + $0xd8] sm:$0xff]
    %v306 = vld [vmem:[#allocation6 + $0xe0] sm:$0xff]
    %v307 = vld [vmem:[#allocation6 + $0xe8] sm:$0xff]
    %v308 = vld [vmem:[#allocation6 + $0xf0] sm:$0xff]
    %v309 = vld [vmem:[#allocation6 + $0xf8] sm:$0xff]
    // While loop
    $region42: #{tpu_custom_call.1} parent=1 // loop_pre_header
      _
    $region43: #{tpu_custom_call.1} parent=1 // loop_header
      %s311 = sphi 0, %s313
      %p312 = scmp.ge.s32.totalorder %s311, %s53
      %v316 = vphi 0.0, %v615
      %v317 = vphi 0.0, %v616
    $region44: #{tpu_custom_call.1} parent=1 // loop_header_branch
      %315 = sbr.rel (%p312) target = $region48
    $region45: #{tpu_custom_call.1} parent=1 // loop_body
      %s318 = smul.u32 %s311, 8
      %s319 = sshra.s32 %s318, 3
      %s320 = sand.u32 %s318, 7
      %s321 = smul.u32 %s319, 4
      %s322 = smul.addr %s321, 8
      %s323 = scalar_lea.vmem [#allocation2], %s322
      %v324 = vld [vmem:[%s323] sm:$0xff]
      %v325 = vld [vmem:[%s323 + $0x8] sm:$0xff]
      %v326 = vld [vmem:[%s323 + $0x10] sm:$0xff]
      %v327 = vld [vmem:[%s323 + $0x18] sm:$0xff]
      %v328 = vpack.c.bf16 %v316, %v316
      %v361 = vunpack.c.l.b16 %v278
      %v362 = vunpack.c.h.b16 %v278
      %v363 = vunpack.c.l.b16 %v279
      %v364 = vunpack.c.h.b16 %v279
      %v365 = vunpack.c.l.b16 %v280
      %v366 = vunpack.c.h.b16 %v280
      %v367 = vunpack.c.l.b16 %v281
      %v368 = vunpack.c.h.b16 %v281
      %v369 = vunpack.c.l.b16 %v282
      %v370 = vunpack.c.h.b16 %v282
      %v371 = vunpack.c.l.b16 %v283
      %v372 = vunpack.c.h.b16 %v283
      %v373 = vunpack.c.l.b16 %v284
      %v374 = vunpack.c.h.b16 %v284
      %v375 = vunpack.c.l.b16 %v285
      %v376 = vunpack.c.h.b16 %v285
      %v377 = vunpack.c.l.b16 %v286
      %v378 = vunpack.c.h.b16 %v286
      %v379 = vunpack.c.l.b16 %v287
      %v380 = vunpack.c.h.b16 %v287
      %v381 = vunpack.c.l.b16 %v288
      %v382 = vunpack.c.h.b16 %v288
      %v383 = vunpack.c.l.b16 %v289
      %v384 = vunpack.c.h.b16 %v289
      %v385 = vunpack.c.l.b16 %v290
      %v386 = vunpack.c.h.b16 %v290
      %v387 = vunpack.c.l.b16 %v291
      %v388 = vunpack.c.h.b16 %v291
      %v389 = vunpack.c.l.b16 %v292
      %v390 = vunpack.c.h.b16 %v292
      %v391 = vunpack.c.l.b16 %v293
      %v392 = vunpack.c.h.b16 %v293
      %v393 = vunpack.c.l.b16 %v294
      %v394 = vunpack.c.h.b16 %v294
      %v395 = vunpack.c.l.b16 %v295
      %v396 = vunpack.c.h.b16 %v295
      %v397 = vunpack.c.l.b16 %v296
      %v398 = vunpack.c.h.b16 %v296
      %v399 = vunpack.c.l.b16 %v297
      %v400 = vunpack.c.h.b16 %v297
      %v401 = vunpack.c.l.b16 %v298
      %v402 = vunpack.c.h.b16 %v298
      %v403 = vunpack.c.l.b16 %v299
      %v404 = vunpack.c.h.b16 %v299
      %v405 = vunpack.c.l.b16 %v300
      %v406 = vunpack.c.h.b16 %v300
      %v407 = vunpack.c.l.b16 %v301
      %v408 = vunpack.c.h.b16 %v301
      %v409 = vunpack.c.l.b16 %v302
      %v410 = vunpack.c.h.b16 %v302
      %v411 = vunpack.c.l.b16 %v303
      %v412 = vunpack.c.h.b16 %v303
      %v413 = vunpack.c.l.b16 %v304
      %v414 = vunpack.c.h.b16 %v304
      %v415 = vunpack.c.l.b16 %v305
      %v416 = vunpack.c.h.b16 %v305
      %v417 = vunpack.c.l.b16 %v306
      %v418 = vunpack.c.h.b16 %v306
      %v419 = vunpack.c.l.b16 %v307
      %v420 = vunpack.c.h.b16 %v307
      %v421 = vunpack.c.l.b16 %v308
      %v422 = vunpack.c.h.b16 %v308
      %v423 = vunpack.c.l.b16 %v309
      %v424 = vunpack.c.h.b16 %v309
      %v425 = vpack.c.b16 %v365, %v361
      %v426 = vpack.c.b16 %v366, %v362
      %v427 = vpack.c.b16 %v367, %v363
      %v428 = vpack.c.b16 %v368, %v364
      %v429 = vpack.c.b16 %v373, %v369
      %v430 = vpack.c.b16 %v374, %v370
      %v431 = vpack.c.b16 %v375, %v371
      %v432 = vpack.c.b16 %v376, %v372
      %v433 = vpack.c.b16 %v381, %v377
      %v434 = vpack.c.b16 %v382, %v378
      %v435 = vpack.c.b16 %v383, %v379
      %v436 = vpack.c.b16 %v384, %v380
      %v437 = vpack.c.b16 %v389, %v385
      %v438 = vpack.c.b16 %v390, %v386
      %v439 = vpack.c.b16 %v391, %v387
      %v440 = vpack.c.b16 %v392, %v388
      %v441 = vpack.c.b16 %v397, %v393
      %v442 = vpack.c.b16 %v398, %v394
      %v443 = vpack.c.b16 %v399, %v395
      %v444 = vpack.c.b16 %v400, %v396
      %v445 = vpack.c.b16 %v405, %v401
      %v446 = vpack.c.b16 %v406, %v402
      %v447 = vpack.c.b16 %v407, %v403
      %v448 = vpack.c.b16 %v408, %v404
      %v449 = vpack.c.b16 %v413, %v409
      %v450 = vpack.c.b16 %v414, %v410
      %v451 = vpack.c.b16 %v415, %v411
      %v452 = vpack.c.b16 %v416, %v412
      %v453 = vpack.c.b16 %v421, %v417
      %v454 = vpack.c.b16 %v422, %v418
      %v455 = vpack.c.b16 %v423, %v419
      %v456 = vpack.c.b16 %v424, %v420
      %489 = vmatpush.bf16.msra.mxu0 %v453
      %490 = vmatpush.bf16.msra.mxu0 %v449
      %491 = vmatpush.bf16.msra.mxu0 %v445
      %492 = vmatpush.bf16.msra.mxu0 %v441
      %493 = vmatpush.bf16.msra.mxu0 %v437
      %494 = vmatpush.bf16.msra.mxu0 %v433
      %495 = vmatpush.bf16.msra.mxu0 %v429
      %496 = vmatpush.bf16.msra.mxu0 %v425
      %497 = vmatmul.bf16.gmra.mxu0 %v328
      %v498 = vpop.f32.mrf.mxu0
      %v499 = vadd.f32 0.0, %v498
      %v500 = vpop.f32.mrf.mxu0
      %501 = vdwg.mxu0
      %502 = vmatpush.bf16.msra.mxu0 %v454
      %503 = vmatpush.bf16.msra.mxu0 %v450
      %504 = vmatpush.bf16.msra.mxu0 %v446
      %505 = vmatpush.bf16.msra.mxu0 %v442
      %506 = vmatpush.bf16.msra.mxu0 %v438
      %507 = vmatpush.bf16.msra.mxu0 %v434
      %508 = vmatpush.bf16.msra.mxu0 %v430
      %509 = vmatpush.bf16.msra.mxu0 %v426
      %510 = vmatmul.bf16.gmra.mxu0 %v328
      %v511 = vpop.f32.mrf.mxu0
      %v512 = vadd.f32 0.0, %v511
      %v513 = vpop.f32.mrf.mxu0
      %514 = vdwg.mxu0
      %515 = vmatpush.bf16.msra.mxu0 %v455
      %516 = vmatpush.bf16.msra.mxu0 %v451
      %517 = vmatpush.bf16.msra.mxu0 %v447
      %518 = vmatpush.bf16.msra.mxu0 %v443
      %519 = vmatpush.bf16.msra.mxu0 %v439
      %520 = vmatpush.bf16.msra.mxu0 %v435
      %521 = vmatpush.bf16.msra.mxu0 %v431
      %522 = vmatpush.bf16.msra.mxu0 %v427
      %523 = vmatmul.bf16.gmra.mxu0 %v328
      %v524 = vpop.f32.mrf.mxu0
      %v525 = vadd.f32 0.0, %v524
      %v526 = vpop.f32.mrf.mxu0
      %527 = vdwg.mxu0
      %528 = vmatpush.bf16.msra.mxu0 %v456
      %529 = vmatpush.bf16.msra.mxu0 %v452
      %530 = vmatpush.bf16.msra.mxu0 %v448
      %531 = vmatpush.bf16.msra.mxu0 %v444
      %532 = vmatpush.bf16.msra.mxu0 %v440
      %533 = vmatpush.bf16.msra.mxu0 %v436
      %534 = vmatpush.bf16.msra.mxu0 %v432
      %535 = vmatpush.bf16.msra.mxu0 %v428
      %536 = vmatmul.bf16.gmra.mxu0 %v328
      %v537 = vpop.f32.mrf.mxu0
      %v538 = vadd.f32 0.0, %v537
      %v539 = vpop.f32.mrf.mxu0
      %540 = vdwg.mxu0
      %v541 = vadd.f32 %v324, %v499
      %v542 = vadd.f32 %v325, %v512
      %v543 = vadd.f32 %v326, %v525
      %v544 = vadd.f32 %v327, %v538
      %v545 = vxor.u32 %v541, 2147483648
      %v546 = vmul.f32 %v545, 1.442695
      %v547 = vpow.pop %v546
      %v548 = vadd.f32 %v547, 1.0
      %v549 = vrcp.pop %v548
      %v550 = vmul.f32 %v548, %v549
      %v551 = vsub.f32 1.0, %v550
      %v552 = vmul.f32 %v549, %v551
      %v553 = vadd.f32 %v549, %v552
      %vm554 = vweird.f32 %v548
      %vm555 = vweird.f32 %v549
      %vm556 = vmor %vm554, %vm555
      %v557 = vsel %vm556, %v549, %v553
      %v558 = vand.u32 2147483647, %v548
      %vm559 = vcmp.eq.f32.partialorder %v558, 8.507059e+37
      %v560 = vand.u32 %v548, 2147483648
      %v561 = vor.u32 1.1754944e-38, %v560
      %v562 = vsel %vm559, %v561, %v557
      %v563 = vmul.f32 1.0, %v562
      %v564 = vxor.u32 %v542, 2147483648
      %v565 = vmul.f32 %v564, 1.442695
      %v566 = vpow.pop %v565
      %v567 = vadd.f32 %v566, 1.0
      %v568 = vrcp.pop %v567
      %v569 = vmul.f32 %v567, %v568
      %v570 = vsub.f32 1.0, %v569
      %v571 = vmul.f32 %v568, %v570
      %v572 = vadd.f32 %v568, %v571
      %vm573 = vweird.f32 %v567
      %vm574 = vweird.f32 %v568
      %vm575 = vmor %vm573, %vm574
      %v576 = vsel %vm575, %v568, %v572
      %v577 = vand.u32 2147483647, %v567
      %vm578 = vcmp.eq.f32.partialorder %v577, 8.507059e+37
      %v579 = vand.u32 %v567, 2147483648
      %v580 = vor.u32 1.1754944e-38, %v579
      %v581 = vsel %vm578, %v580, %v576
      %v582 = vmul.f32 1.0, %v581
      %v583 = vtanh.pop %v543
      %v584 = vxor.u32 %v544, 2147483648
      %v585 = vmul.f32 %v584, 1.442695
      %v586 = vpow.pop %v585
      %v587 = vadd.f32 %v586, 1.0
      %v588 = vrcp.pop %v587
      %v589 = vmul.f32 %v587, %v588
      %v590 = vsub.f32 1.0, %v589
      %v591 = vmul.f32 %v588, %v590
      %v592 = vadd.f32 %v588, %v591
      %vm593 = vweird.f32 %v587
      %vm594 = vweird.f32 %v588
      %vm595 = vmor %vm593, %vm594
      %v596 = vsel %vm595, %v588, %v592
      %v597 = vand.u32 2147483647, %v587
      %vm598 = vcmp.eq.f32.partialorder %v597, 8.507059e+37
      %v599 = vand.u32 %v587, 2147483648
      %v600 = vor.u32 1.1754944e-38, %v599
      %v601 = vsel %vm598, %v600, %v596
      %v602 = vmul.f32 1.0, %v601
      %v603 = vmul.f32 %v582, %v317
      %v604 = vmul.f32 %v563, %v583
      %v605 = vadd.f32 %v603, %v604
      %v606 = vtanh.pop %v605
      %v607 = vmul.f32 %v602, %v606
      %v608 = vstv %s311
      %vm609 = vcmp.lt.s32.totalorder %v608, %v54
      %v610 = vsel %vm609, 1, 0
      %611 = vset.pattern.permute.xlu0 0
      %612 = vperm.xlu0 %611, %v610
      %v613 = vpop.permute.xlu0 %612
      %vm614 = vcmp.eq.s32.totalorder %v613, 1
      %v615 = vsel %vm614, %v607, %v316
      %v616 = vsel %vm614, %v605, %v317
    $region46: #{tpu_custom_call.1} parent=1 // loop_footer
      %s313 = sadd.s32 %s311, 1
    $region47: #{tpu_custom_call.1} parent=1 // loop_footer_branch
      %310 = sbr.rel target = $region43
    $region48: #{tpu_custom_call.1} parent=1 // loop_exit
      _
    %v617 = vstv %s53
    %vm618 = vcmp.eq.s32.totalorder %v54, %v617
    %v619 = vsel %vm618, 1, 0
    %620 = vset.pattern.permute.xlu0 0
    %621 = vperm.xlu0 %620, %v619
    %v622 = vpop.permute.xlu0 %621
    %vm623 = vcmp.eq.s32.totalorder %v622, 1
    %v624 = vsel %vm623, %v316, 0.0
    %v625 = vpack.c.bf16 %v624, %v624
    %v626 = vld [vmem:[%s6] sm:$0xf]
    %v627 = vld [vmem:[%s6 + $0x4] sm:$0xf]
    %v628 = vld [vmem:[%s6 + $0x8] sm:$0xf]
    %v629 = vld [vmem:[%s6 + $0xc] sm:$0xf]
    %v630 = vld [vmem:[%s6 + $0x10] sm:$0xf]
    %v631 = vld [vmem:[%s6 + $0x14] sm:$0xf]
    %v632 = vld [vmem:[%s6 + $0x18] sm:$0xf]
    %v633 = vld [vmem:[%s6 + $0x1c] sm:$0xf]
    %v634 = vld [vmem:[%s6 + $0x20] sm:$0xf]
    %v635 = vld [vmem:[%s6 + $0x24] sm:$0xf]
    %v636 = vld [vmem:[%s6 + $0x28] sm:$0xf]
    %v637 = vld [vmem:[%s6 + $0x2c] sm:$0xf]
    %v638 = vld [vmem:[%s6 + $0x30] sm:$0xf]
    %v639 = vld [vmem:[%s6 + $0x34] sm:$0xf]
    %v640 = vld [vmem:[%s6 + $0x38] sm:$0xf]
    %v641 = vld [vmem:[%s6 + $0x3c] sm:$0xf]
    %v642 = vld [vmem:[%s7] sm:$0x1]
    %v644 = vperm.slane %v642, 0
    %v662 = vunpack.c.l.b16 %v626
    %v663 = vunpack.c.l.b16 %v627
    %v664 = vunpack.c.l.b16 %v628
    %v665 = vunpack.c.l.b16 %v629
    %v666 = vunpack.c.l.b16 %v630
    %v667 = vunpack.c.l.b16 %v631
    %v668 = vunpack.c.l.b16 %v632
    %v669 = vunpack.c.l.b16 %v633
    %v670 = vunpack.c.l.b16 %v634
    %v671 = vunpack.c.l.b16 %v635
    %v672 = vunpack.c.l.b16 %v636
    %v673 = vunpack.c.l.b16 %v637
    %v674 = vunpack.c.l.b16 %v638
    %v675 = vunpack.c.l.b16 %v639
    %v676 = vunpack.c.l.b16 %v640
    %v677 = vunpack.c.l.b16 %v641
    %v678 = vpack.c.b16 %v663, %v662
    %v679 = vpack.c.b16 %v665, %v664
    %v680 = vpack.c.b16 %v667, %v666
    %v681 = vpack.c.b16 %v669, %v668
    %v682 = vpack.c.b16 %v671, %v670
    %v683 = vpack.c.b16 %v673, %v672
    %v684 = vpack.c.b16 %v675, %v674
    %v685 = vpack.c.b16 %v677, %v676
    %694 = vmatpush.bf16.msra.mxu0 %v685
    %695 = vmatpush.bf16.msra.mxu0 %v684
    %696 = vmatpush.bf16.msra.mxu0 %v683
    %697 = vmatpush.bf16.msra.mxu0 %v682
    %698 = vmatpush.bf16.msra.mxu0 %v681
    %699 = vmatpush.bf16.msra.mxu0 %v680
    %700 = vmatpush.bf16.msra.mxu0 %v679
    %701 = vmatpush.bf16.msra.mxu0 %v678
    %702 = vmatmul.bf16.gmra.mxu0 %v625
    %v703 = vpop.f32.mrf.mxu0
    %v704 = vadd.f32 %v644, %v703
    %v705 = vpop.f32.mrf.mxu0
    %706 = vdwg.mxu0
    %v707 = vmax.f32 %v704, 0.0
    %v708 = vpack.c.bf16 %v707, %v707
    %v709 = vld [vmem:[%s8] sm:$0xf]
    %v710 = vld [vmem:[%s8 + $0x4] sm:$0xf]
    %v711 = vld [vmem:[%s8 + $0x8] sm:$0xf]
    %v712 = vld [vmem:[%s8 + $0xc] sm:$0xf]
    %v713 = vld [vmem:[%s8 + $0x10] sm:$0xf]
    %v714 = vld [vmem:[%s8 + $0x14] sm:$0xf]
    %v715 = vld [vmem:[%s8 + $0x18] sm:$0xf]
    %v716 = vld [vmem:[%s8 + $0x1c] sm:$0xf]
    %v717 = vld [vmem:[%s8 + $0x20] sm:$0xf]
    %v718 = vld [vmem:[%s8 + $0x24] sm:$0xf]
    %v719 = vld [vmem:[%s8 + $0x28] sm:$0xf]
    %v720 = vld [vmem:[%s8 + $0x2c] sm:$0xf]
    %v721 = vld [vmem:[%s8 + $0x30] sm:$0xf]
    %v722 = vld [vmem:[%s8 + $0x34] sm:$0xf]
    %v723 = vld [vmem:[%s8 + $0x38] sm:$0xf]
    %v724 = vld [vmem:[%s8 + $0x3c] sm:$0xf]
    %v725 = vld [vmem:[#allocation5] sm:$0x1]
    %v727 = vperm.slane %v725, 0
    %v745 = vunpack.c.l.b16 %v709
    %v746 = vunpack.c.l.b16 %v710
    %v747 = vunpack.c.l.b16 %v711
    %v748 = vunpack.c.l.b16 %v712
    %v749 = vunpack.c.l.b16 %v713
    %v750 = vunpack.c.l.b16 %v714
    %v751 = vunpack.c.l.b16 %v715
    %v752 = vunpack.c.l.b16 %v716
    %v753 = vunpack.c.l.b16 %v717
    %v754 = vunpack.c.l.b16 %v718
    %v755 = vunpack.c.l.b16 %v719
    %v756 = vunpack.c.l.b16 %v720
    %v757 = vunpack.c.l.b16 %v721
    %v758 = vunpack.c.l.b16 %v722
    %v759 = vunpack.c.l.b16 %v723
    %v760 = vunpack.c.l.b16 %v724
    %v761 = vpack.c.b16 %v746, %v745
    %v762 = vpack.c.b16 %v748, %v747
    %v763 = vpack.c.b16 %v750, %v749
    %v764 = vpack.c.b16 %v752, %v751
    %v765 = vpack.c.b16 %v754, %v753
    %v766 = vpack.c.b16 %v756, %v755
    %v767 = vpack.c.b16 %v758, %v757
    %v768 = vpack.c.b16 %v760, %v759
    %777 = vmatpush.bf16.msra.mxu0 %v768
    %778 = vmatpush.bf16.msra.mxu0 %v767
    %779 = vmatpush.bf16.msra.mxu0 %v766
    %780 = vmatpush.bf16.msra.mxu0 %v765
    %781 = vmatpush.bf16.msra.mxu0 %v764
    %782 = vmatpush.bf16.msra.mxu0 %v763
    %783 = vmatpush.bf16.msra.mxu0 %v762
    %784 = vmatpush.bf16.msra.mxu0 %v761
    %785 = vmatmul.bf16.gmra.mxu0 %v708
    %v786 = vpop.f32.mrf.mxu0
    %v787 = vadd.f32 %v727, %v786
    %v788 = vpop.f32.mrf.mxu0
    %789 = vdwg.mxu0
    %v790 = vxor.u32 %v787, 2147483648
    %v791 = vmul.f32 %v790, 1.442695
    %v792 = vpow.pop %v791
    %v793 = vadd.f32 %v792, 1.0
    %v794 = vrcp.pop %v793
    %v795 = vmul.f32 %v793, %v794
    %v796 = vsub.f32 1.0, %v795
    %v797 = vmul.f32 %v794, %v796
    %v798 = vadd.f32 %v794, %v797
    %vm799 = vweird.f32 %v793
    %vm800 = vweird.f32 %v794
    %vm801 = vmor %vm799, %vm800
    %v802 = vsel %vm801, %v794, %v798
    %v803 = vand.u32 2147483647, %v793
    %vm804 = vcmp.eq.f32.partialorder %v803, 8.507059e+37
    %v805 = vand.u32 %v793, 2147483648
    %v806 = vor.u32 1.1754944e-38, %v805
    %v807 = vsel %vm804, %v806, %v802
    %v808 = vmul.f32 1.0, %v807
    %vm809 = vcmask 7168
    %810 = vst.msk [vmem:[%s10] sm:$0xff] %vm809, %v808
    // Predicated region
    $region49: #{tpu_custom_call.1} parent=1 // pred_check
      _
    $region50: #{tpu_custom_call.1} parent=1 // pred_check_branch
      %812 = sbr.rel (0) target = $region52
    $region51: #{tpu_custom_call.1} parent=1 // pred_region
      _
    $region52: #{tpu_custom_call.1} parent=1 // pred_fallthru
      _
    // Predicated region
    $region53: #{tpu_custom_call.1} parent=1 // pred_check
      _
    $region54: #{tpu_custom_call.1} parent=1 // pred_check_branch
      %814 = sbr.rel (0) target = $region56
    $region55: #{tpu_custom_call.1} parent=1 // pred_region
      _
    $region56: #{tpu_custom_call.1} parent=1 // pred_fallthru
      _
    %815 = vsyncpa [#allocation7], 1

</llo_original>
